<compile_context>
chip_gen: v7x
topology: tpu7x:2x2x1
jax: 0.10.0
libtpu: 0.0.40
codegen_flags: <defaults>
</compile_context>

<pallas_src>
import functools

import jax
import jax.numpy as jnp
from jax import lax
from jax.experimental import pallas as pl
from jax.experimental.pallas import tpu as pltpu

EPS = 1e-5


def _lrp_linear_kernel(a_ref, r_ref, w_ref, o_ref, *, out_total, tout,
                       single_out_step):
    """One (row-tile i, out-tile j) grid step of the LRP z+ backward pass."""
    j = pl.program_id(1)
    mask_needed = (out_total % tout) != 0  # static

    a = a_ref[...]                              # (TN, IN)    model dtype
    # z+ rule: clamp W >= 0 in-kernel (VPU, hides under MXU/DMA slack; avoids a
    # wrapper-side W-sized HBM pass).
    w = jnp.maximum(w_ref[...], 0.0)            # (TOUT, IN)  model dtype

    if mask_needed:
        # Last OUT tile may contain padded (undefined) rows of W; zero them so
        # garbage (possibly NaN/Inf) cannot contaminate the accumulation.
        row_ids = j * tout + lax.broadcasted_iota(jnp.int32, w.shape, 0)
        w = jnp.where(row_ids < out_total, w, jnp.zeros_like(w))

    # z = a @ W+.T + eps   (contract over IN; MXU, f32 accumulation; native
    # transposed-RHS dot_general — no XLU transpose of the W tile).
    z = lax.dot_general(
        a, w,
        dimension_numbers=(((1,), (1,)), ((), ())),
        preferred_element_type=jnp.float32,
    ) + EPS                                     # (TN, TOUT)  f32

    # s = r / z : EUP approximate reciprocal + one Newton refinement step
    # (keeps the divide off the VALU path while staying ~f32 accurate).
    inv_z = pl.reciprocal(z, approx=True)
    inv_z = inv_z * (2.0 - z * inv_z)
    s = r_ref[...].astype(jnp.float32) * inv_z  # (TN, TOUT)  f32

    if mask_needed:
        # Padded columns of r/z would otherwise feed garbage into s @ W+.
        col_ids = j * tout + lax.broadcasted_iota(jnp.int32, s.shape, 1)
        s = jnp.where(col_ids < out_total, s, 0.0)

    # c (+)= s @ W+   (second MXU pass; s cast to the weight dtype so bf16
    # weights stay bf16 on the MXU, f32 accumulation).
    c = jnp.dot(s.astype(w.dtype), w, preferred_element_type=jnp.float32)

    if single_out_step:
        # Whole W resident in VMEM: single OUT step, no accumulation needed.
        o_ref[...] = (a.astype(jnp.float32) * c).astype(o_ref.dtype)
    else:
        # P3 accumulator directly in the VMEM-resident output block: its block
        # index (i, 0) is constant across j, so it is written back to HBM only
        # after the last OUT tile.
        @pl.when(j == 0)
        def _init():
            o_ref[...] = jnp.zeros_like(o_ref)

        o_ref[...] = o_ref[...] + c

        @pl.when(j == pl.num_programs(1) - 1)
        def _finalize():
            o_ref[...] = o_ref[...] * a.astype(jnp.float32)


def _tpu_hw_info():
    """(physical per-core VMEM bytes, TensorCores/chip) with safe fallbacks."""
    vmem_bytes = 64 * 1024 * 1024          # conservative fallback: v7x = 64 MiB
    num_cores = 1
    try:
        vmem_bytes = int(pltpu.get_tpu_info().vmem_capacity_bytes)
    except Exception:
        pass
    try:
        kind = jax.devices()[0].device_kind.lower()
        if "v7" in kind:
            num_cores = 2                  # v7x: 2 TensorCores per chip
    except Exception:
        pass
    return vmem_bytes, num_cores


def _largest_divisor_multiple(total, step, cap):
    """Largest multiple of `step` that divides `total` and is <= cap, or None."""
    cap = min(cap, total)
    best = None
    k = step
    while k <= cap:
        if total % k == 0:
            best = k
        k += step
    return best


def _pick_out_tile(out_f, in_f, w_itemsize, vmem_bytes):
    # Whole-W residency: the (double-buffered) weight must fit a per-generation
    # budget (~19 MiB on v7x, ~38 MiB on v5e/v6e).  Then the W block index is
    # constant over the grid -> W is DMA'd exactly once.
    w_budget = int(0.30 * vmem_bytes)
    if 2 * out_f * in_f * w_itemsize <= w_budget or out_f <= 128:
        return out_f
    # Otherwise tile OUT: keep the W-tile double buffer inside the budget,
    # capped at 512 (big-VMEM parts) / 256 (v7x) rows.
    cap = (w_budget // (2 * in_f * w_itemsize)) // 128 * 128
    cap = max(128, min(cap, 512 if vmem_bytes >= (100 << 20) else 256))
    # Prefer a tile that evenly divides OUT so the padding masks compile away.
    div = _largest_divisor_multiple(out_f, 128, cap)
    return div if div is not None else cap


def _pick_row_tile(n, in_f, tout, a_itemsize, r_itemsize, vmem_bytes, num_cores):
    # Budget for the double-buffered a / r / out streams (out is f32).
    row_budget = int(0.40 * vmem_bytes)
    per_row = 2 * in_f * a_itemsize + 2 * tout * r_itemsize + 2 * in_f * 4
    cap = (row_budget // max(per_row, 1)) // 8 * 8
    cap = max(8, min(cap, 512 if vmem_bytes >= (100 << 20) else 256))
    if num_cores > 1 and n > 8:
        # Guarantee >= num_cores row tiles so every TensorCore gets work on the
        # "parallel" axis (row padding is safe: rows never mix in the math).
        cap = min(cap, max(8, ((pl.cdiv(n, num_cores) + 7) // 8) * 8))
    if n <= cap:
        return n
    div = _largest_divisor_multiple(n, 8, cap)
    return div if div is not None else cap


def lrp_linear(a, r, weight, bias=None, *, tn=None, tout=None):
    """LRP z+ rule relevance propagation through a Linear layer.

    a: (N, IN) activations, r: (N, OUT) incoming relevance, weight: (OUT, IN)
    PyTorch Linear weight.  Returns (N, IN) relevance in float32.
    """
    n, in_f = a.shape
    out_f, in_f2 = weight.shape
    assert in_f2 == in_f and r.shape == (n, out_f)
    del bias  # z+ rule replaces the bias with zeros; it never enters the math.

    vmem_bytes, num_cores = _tpu_hw_info()
    a_isize = jnp.dtype(a.dtype).itemsize
    r_isize = jnp.dtype(r.dtype).itemsize
    w_isize = jnp.dtype(weight.dtype).itemsize

    if tout is None:
        tout = _pick_out_tile(out_f, in_f, w_isize, vmem_bytes)
    if tn is None:
        tn = _pick_row_tile(n, in_f, tout, a_isize, r_isize, vmem_bytes,
                            num_cores)

    grid = (pl.cdiv(n, tn), pl.cdiv(out_f, tout))
    single_out_step = grid[1] == 1

    kernel = functools.partial(
        _lrp_linear_kernel, out_total=out_f, tout=tout,
        single_out_step=single_out_step)

    # VMEM limit from the actual double-buffered tile footprint plus headroom,
    # capped at 75% of physical per-core VMEM (48 MiB on v7x, 96 MiB on v5e/v6e).
    footprint = (2 * tn * in_f * a_isize        # a
                 + 2 * tn * tout * r_isize      # r
                 + 2 * tout * in_f * w_isize    # W
                 + 2 * tn * in_f * 4)           # out (f32)
    vmem_limit = min(int(0.75 * vmem_bytes),
                     max(int(1.5 * footprint) + (8 << 20), 32 << 20))

    return pl.pallas_call(
        kernel,
        out_shape=jax.ShapeDtypeStruct((n, in_f), jnp.float32),
        grid_spec=pltpu.PrefetchScalarGridSpec(
            num_scalar_prefetch=0,
            grid=grid,
            in_specs=[
                pl.BlockSpec((tn, in_f), lambda i, j: (i, 0)),    # a
                pl.BlockSpec((tn, tout), lambda i, j: (i, j)),    # r
                pl.BlockSpec((tout, in_f), lambda i, j: (j, 0)),  # W (constant -> fetched once when resident)
            ],
            out_specs=pl.BlockSpec((tn, in_f), lambda i, j: (i, 0)),
        ),
        compiler_params=pltpu.CompilerParams(
            dimension_semantics=("parallel", "arbitrary"),
            vmem_limit_bytes=vmem_limit,
        ),
    )(a, r, weight)


def _reference(a, r, weight):
    """Pure-JAX f32 reference of the PyTorch module's forward."""
    w_pos = jnp.maximum(weight.astype(jnp.float32), 0.0)
    a32 = a.astype(jnp.float32)
    r32 = r.astype(jnp.float32)
    z = a32 @ w_pos.T + EPS
    s = r32 / z
    c = s @ w_pos
    return a32 * c


if __name__ == "__main__":
    key = jax.random.PRNGKey(0)
    k_a, k_r, k_w = jax.random.split(key, 3)

    N, IN, OUT = 16, 128, 256

    # Typical LRP use has post-ReLU (non-negative) activations; abs keeps z well
    # away from zero so r/z is well conditioned for the numerical check.
    a = jnp.abs(jax.random.normal(k_a, (N, IN), dtype=jnp.float32))
    r = jnp.abs(jax.random.normal(k_r, (N, OUT), dtype=jnp.float32))
    weight = jax.random.normal(k_w, (OUT, IN), dtype=jnp.float32)
    bias = jnp.zeros((OUT,), jnp.float32)

    ref = _reference(a, r, weight)

    # 1) Default (auto) tiling — whole W resident in VMEM, single OUT step.
    out = jax.block_until_ready(lrp_linear(a, r, weight, bias))
    assert out.shape == (N, IN)
    assert jnp.allclose(out, ref, rtol=1e-3, atol=1e-3), "default-tiling mismatch"

    # 2) Forced small tiles — exercises the OUT-reduction accumulation into o_ref.
    out_t = jax.block_until_ready(lrp_linear(a, r, weight, bias, tn=8, tout=128))
    assert jnp.allclose(out_t, ref, rtol=1e-3, atol=1e-3), "tiled mismatch"

    # 3) Non-divisible OUT — exercises the padded-tile masks on the last OUT tile.
    OUT2 = 192
    r2 = jnp.abs(jax.random.normal(k_r, (N, OUT2), dtype=jnp.float32))
    w2 = jax.random.normal(k_w, (OUT2, IN), dtype=jnp.float32)
    ref2 = _reference(a, r2, w2)
    out2 = jax.block_until_ready(lrp_linear(a, r2, w2, tn=8, tout=128))
    assert jnp.allclose(out2, ref2, rtol=1e-3, atol=1e-3), "masked-tile mismatch"

    # 4) bf16 end-to-end (no wrapper up-cast): halves HBM traffic, MXU-native dtype.
    a_bf = a.astype(jnp.bfloat16)
    r_bf = r.astype(jnp.bfloat16)
    w_bf = weight.astype(jnp.bfloat16)
    ref_bf = _reference(a_bf, r_bf, w_bf)
    out_bf = jax.block_until_ready(lrp_linear(a_bf, r_bf, w_bf))
    assert out_bf.dtype == jnp.float32
    assert jnp.allclose(out_bf, ref_bf, rtol=3e-2, atol=3e-2), "bf16 mismatch"

    # TODO(synk): top_k relevance filtering (relevance_filter) is not implemented
    # (module default top_k=0.0 disables it).
    print("KERNEL_OK")
</pallas_src>

<mosaic_0001>
module attributes {stable_mosaic.version = 11 : i64} {
  func.func @_lrp_linear_kernel(%arg0: i32, %arg1: i32, %arg2: memref<16x128xf32, #tpu.memory_space<vmem>>, %arg3: memref<16x256xf32, #tpu.memory_space<vmem>>, %arg4: memref<256x128xf32, #tpu.memory_space<vmem>>, %arg5: memref<16x128xf32, #tpu.memory_space<vmem>>) attributes {dimension_semantics = [#tpu.dimension_semantics<parallel>, #tpu.dimension_semantics<arbitrary>], iteration_bounds = array<i64: 1, 1>, scalar_prefetch = 0 : i64, scratch_operands = 0 : i64, tpu.core_type = #tpu.core_type<tc>, window_params = [{transform_indices = @transform_0, window_bounds = array<i64: 16, 128>}, {transform_indices = @transform_1, window_bounds = array<i64: 16, 256>}, {transform_indices = @transform_2, window_bounds = array<i64: 256, 128>}, {transform_indices = @transform_3, window_bounds = array<i64: 16, 128>}]} {
    %c0 = arith.constant 0 : index
    %c0_0 = arith.constant 0 : index
    %0 = vector.load %arg2[%c0, %c0_0] : memref<16x128xf32, #tpu.memory_space<vmem>>, vector<16x128xf32>
    %c0_1 = arith.constant 0 : index
    %c0_2 = arith.constant 0 : index
    %1 = vector.load %arg4[%c0_1, %c0_2] : memref<256x128xf32, #tpu.memory_space<vmem>>, vector<256x128xf32>
    %cst = arith.constant 0.000000e+00 : f32
    %2 = vector.broadcast %cst : f32 to vector<256x128xf32>
    %3 = arith.maximumf %1, %2 : vector<256x128xf32>
    %cst_3 = arith.constant dense<0.000000e+00> : vector<16x256xf32>
    %4 = tpu.matmul %0, %3, %cst_3 {dimension_numbers = #tpu.dot_dimension_numbers<[1], [1], [0], [0], [0, 0, 1, 0], [], []>} : vector<16x128xf32>, vector<256x128xf32>, vector<16x256xf32> -> vector<16x256xf32>
    %cst_4 = arith.constant 9.99999974E-6 : f32
    %5 = vector.broadcast %cst_4 : f32 to vector<16x256xf32>
    %6 = arith.addf %4, %5 : vector<16x256xf32>
    %7 = tpu.reciprocal %6 {approx = true} : vector<16x256xf32> -> vector<16x256xf32>
    %8 = arith.mulf %6, %7 : vector<16x256xf32>
    %cst_5 = arith.constant 2.000000e+00 : f32
    %9 = vector.broadcast %cst_5 : f32 to vector<16x256xf32>
    %10 = arith.subf %9, %8 : vector<16x256xf32>
    %11 = arith.mulf %7, %10 : vector<16x256xf32>
    %c0_6 = arith.constant 0 : index
    %c0_7 = arith.constant 0 : index
    %12 = vector.load %arg3[%c0_6, %c0_7] : memref<16x256xf32, #tpu.memory_space<vmem>>, vector<16x256xf32>
    %13 = arith.mulf %12, %11 : vector<16x256xf32>
    %cst_8 = arith.constant dense<0.000000e+00> : vector<16x128xf32>
    %14 = tpu.matmul %13, %3, %cst_8 {dimension_numbers = #tpu.dot_dimension_numbers<[1], [0], [0], [1], [0, 0, 1, 1], [], []>} : vector<16x256xf32>, vector<256x128xf32>, vector<16x128xf32> -> vector<16x128xf32>
    %15 = arith.mulf %0, %14 : vector<16x128xf32>
    %c0_9 = arith.constant 0 : index
    %c0_10 = arith.constant 0 : index
    %16 = vector.load %arg5[%c0_9, %c0_10] : memref<16x128xf32, #tpu.memory_space<vmem>>, vector<16x128xf32>
    tpu.vector_store %arg5[%c0_9, %c0_10], %15 {strides = array<i32>} : memref<16x128xf32, #tpu.memory_space<vmem>>, vector<16x128xf32>,
    return
  }
  func.func @transform_0(%arg0: i32, %arg1: i32) -> (i32, i32) {
    %c0_i32 = arith.constant 0 : i32
    %c0_i32_0 = arith.constant 0 : i32
    return %arg0, %c0_i32 : i32, i32
  }
  func.func @transform_1(%arg0: i32, %arg1: i32) -> (i32, i32) {
    %c0_i32 = arith.constant 0 : i32
    return %arg0, %arg1 : i32, i32
  }
  func.func @transform_2(%arg0: i32, %arg1: i32) -> (i32, i32) {
    %c0_i32 = arith.constant 0 : i32
    %c0_i32_0 = arith.constant 0 : i32
    return %arg1, %c0_i32 : i32, i32
  }
  func.func @transform_3(%arg0: i32, %arg1: i32) -> (i32, i32) {
    %c0_i32 = arith.constant 0 : i32
    %c0_i32_0 = arith.constant 0 : i32
    return %arg0, %c0_i32 : i32, i32
  }
}

</mosaic_0001>

<llo_original>
// kernel: tpu_custom_call.1
$region0: #{tpu_custom_call.1}
  #allocation0 [shape = 'u32[]', space=smem, size = 0x4, offset = 0x4, fixed_abs, tag = 'smem constant byte address 0x4 - core index']
  #allocation1 [shape = 'u32[144,128]{1,0:T(1,128)}', space=vmem, size = 0x12000, scoped, tag = 'internal scratch']
  %s0 = inlined_call_operand.hbm [shape: f32[16,128], index: 0, kind: input, shape index: {}]
  %s1 = inlined_call_operand.hbm [shape: f32[16,256], index: 1, kind: input, shape index: {}]
  %s2 = inlined_call_operand.hbm [shape: f32[256,128], index: 2, kind: input, shape index: {}]
  %s3 = inlined_call_operand.hbm [shape: f32[16,128], index: 3, kind: output, shape index: {}]
  %s4 = sld [smem:[#allocation0]]
  $region34: #{tpu_custom_call.1} parent=0
    _
  %s6 = ssub.s32 1, %s4
  %s7 = scalar_select 0, %s6, %s4
  $region1: #{tpu_custom_call.1} parent=0
    #allocation2 [shape = 'u8[8192]{0}', space=vmem, size = 0x2000, scoped, tag = 'input window, operand 0, single buffered']
    #allocation3 [shape = 's32[1]{0}', space=sflag, size = 0x4, scoped, tag = 'scoped memory for tpu_custom_call.1']
    #allocation4 [shape = 's32[1]{0}', space=sflag, size = 0x4, scoped, tag = 'scoped memory for tpu_custom_call.1']
    #allocation5 [shape = 'u8[16384]{0}', space=vmem, size = 0x4000, scoped, tag = 'input window, operand 1, single buffered']
    #allocation6 [shape = 's32[1]{0}', space=sflag, size = 0x4, scoped, tag = 'scoped memory for tpu_custom_call.1']
    #allocation7 [shape = 'u8[131072]{0}', space=vmem, size = 0x20000, scoped, tag = 'input window, operand 2, single buffered']
    #allocation8 [shape = 'u8[8192]{0}', space=vmem, size = 0x2000, scoped, tag = 'output window, operand 0, single buffered']
    %8 = vsyncpa [#allocation3], 0
    %9 = vsyncpa [#allocation6], 0
    %10 = vsyncpa [#allocation4], 0
    // Predicated region
    $region2: #{tpu_custom_call.1} parent=1 // pred_check
      _
    $region3: #{tpu_custom_call.1} parent=1 // pred_check_branch
      %12 = sbr.rel (0) target = $region5
    $region4: #{tpu_custom_call.1} parent=1 // pred_region
      %s14 = ssub.s32 256, 256
      %15 = vsyncadd [#allocation3], %s14
      %s16 = sshll.u32 [#allocation2], 4
      %s17 = int_to_ptr.vmem [resolvable:$true] %s16
      %22 = dma.hbm_to_vmem [thread:$0]  %s0, 256, %s17, [#allocation3], 128, 128, 8
    $region5: #{tpu_custom_call.1} parent=1 // pred_fallthru
      _
    // Predicated region
    $region6: #{tpu_custom_call.1} parent=1 // pred_check
      _
    $region7: #{tpu_custom_call.1} parent=1 // pred_check_branch
      %24 = sbr.rel (0) target = $region9
    $region8: #{tpu_custom_call.1} parent=1 // pred_region
      %s26 = ssub.s32 512, 512
      %27 = vsyncadd [#allocation6], %s26
      %s28 = sshll.u32 [#allocation5], 4
      %s29 = int_to_ptr.vmem [resolvable:$true] %s28
      %34 = dma.hbm_to_vmem [thread:$0]  %s1, 512, %s29, [#allocation6], 256, 256, 16
    $region9: #{tpu_custom_call.1} parent=1 // pred_fallthru
      _
    // Predicated region
    $region10: #{tpu_custom_call.1} parent=1 // pred_check
      _
    $region11: #{tpu_custom_call.1} parent=1 // pred_check_branch
      %36 = sbr.rel (0) target = $region13
    $region12: #{tpu_custom_call.1} parent=1 // pred_region
      %s38 = ssub.s32 4096, 4096
      %39 = vsyncadd [#allocation6], %s38
      %s40 = sshll.u32 [#allocation7], 4
      %s41 = int_to_ptr.vmem [resolvable:$true] %s40
      %46 = dma.hbm_to_vmem [thread:$0]  %s2, 4096, %s41, [#allocation6], 128, 128, 8
    $region13: #{tpu_custom_call.1} parent=1 // pred_fallthru
      _
    // Predicated region
    $region14: #{tpu_custom_call.1} parent=1 // pred_check
      _
    $region15: #{tpu_custom_call.1} parent=1 // pred_check_branch
      %48 = sbr.rel (0) target = $region17
    $region16: #{tpu_custom_call.1} parent=1 // pred_region
      %49 = dma.done [#allocation3], 256
    $region17: #{tpu_custom_call.1} parent=1 // pred_fallthru
      _
    // Predicated region
    $region18: #{tpu_custom_call.1} parent=1 // pred_check
      _
    $region19: #{tpu_custom_call.1} parent=1 // pred_check_branch
      %51 = sbr.rel (0) target = $region21
    $region20: #{tpu_custom_call.1} parent=1 // pred_region
      %52 = dma.done [#allocation6], 512
    $region21: #{tpu_custom_call.1} parent=1 // pred_fallthru
      _
    // Predicated region
    $region22: #{tpu_custom_call.1} parent=1 // pred_check
      _
    $region23: #{tpu_custom_call.1} parent=1 // pred_check_branch
      %54 = sbr.rel (0) target = $region25
    $region24: #{tpu_custom_call.1} parent=1 // pred_region
      %55 = dma.done [#allocation6], 4096
    $region25: #{tpu_custom_call.1} parent=1 // pred_fallthru
      _
    %v56 = vld [vmem:[#allocation2] sm:$0xff]
    %v57 = vld [vmem:[#allocation2 + $0x8] sm:$0xff]
    %v58 = vld [vmem:[#allocation7] sm:$0xff]
    %v59 = vld [vmem:[#allocation7 + $0x8] sm:$0xff]
    %v60 = vld [vmem:[#allocation7 + $0x10] sm:$0xff]
    %v61 = vld [vmem:[#allocation7 + $0x18] sm:$0xff]
    %v62 = vld [vmem:[#allocation7 + $0x20] sm:$0xff]
    %v63 = vld [vmem:[#allocation7 + $0x28] sm:$0xff]
    %v64 = vld [vmem:[#allocation7 + $0x30] sm:$0xff]
    %v65 = vld [vmem:[#allocation7 + $0x38] sm:$0xff]
    %v66 = vld [vmem:[#allocation7 + $0x40] sm:$0xff]
    %v67 = vld [vmem:[#allocation7 + $0x48] sm:$0xff]
    %v68 = vld [vmem:[#allocation7 + $0x50] sm:$0xff]
    %v69 = vld [vmem:[#allocation7 + $0x58] sm:$0xff]
    %v70 = vld [vmem:[#allocation7 + $0x60] sm:$0xff]
    %v71 = vld [vmem:[#allocation7 + $0x68] sm:$0xff]
    %v72 = vld [vmem:[#allocation7 + $0x70] sm:$0xff]
    %v73 = vld [vmem:[#allocation7 + $0x78] sm:$0xff]
    %v74 = vld [vmem:[#allocation7 + $0x80] sm:$0xff]
    %v75 = vld [vmem:[#allocation7 + $0x88] sm:$0xff]
    %v76 = vld [vmem:[#allocation7 + $0x90] sm:$0xff]
    %v77 = vld [vmem:[#allocation7 + $0x98] sm:$0xff]
    %v78 = vld [vmem:[#allocation7 + $0xa0] sm:$0xff]
    %v79 = vld [vmem:[#allocation7 + $0xa8] sm:$0xff]
    %v80 = vld [vmem:[#allocation7 + $0xb0] sm:$0xff]
    %v81 = vld [vmem:[#allocation7 + $0xb8] sm:$0xff]
    %v82 = vld [vmem:[#allocation7 + $0xc0] sm:$0xff]
    %v83 = vld [vmem:[#allocation7 + $0xc8] sm:$0xff]
    %v84 = vld [vmem:[#allocation7 + $0xd0] sm:$0xff]
    %v85 = vld [vmem:[#allocation7 + $0xd8] sm:$0xff]
    %v86 = vld [vmem:[#allocation7 + $0xe0] sm:$0xff]
    %v87 = vld [vmem:[#allocation7 + $0xe8] sm:$0xff]
    %v88 = vld [vmem:[#allocation7 + $0xf0] sm:$0xff]
    %v89 = vld [vmem:[#allocation7 + $0xf8] sm:$0xff]
    %v90 = vmax.f32 %v58, 0.0
    %v91 = vmax.f32 %v59, 0.0
    %v92 = vmax.f32 %v60, 0.0
    %v93 = vmax.f32 %v61, 0.0
    %v94 = vmax.f32 %v62, 0.0
    %v95 = vmax.f32 %v63, 0.0
    %v96 = vmax.f32 %v64, 0.0
    %v97 = vmax.f32 %v65, 0.0
    %v98 = vmax.f32 %v66, 0.0
    %v99 = vmax.f32 %v67, 0.0
    %v100 = vmax.f32 %v68, 0.0
    %v101 = vmax.f32 %v69, 0.0
    %v102 = vmax.f32 %v70, 0.0
    %v103 = vmax.f32 %v71, 0.0
    %v104 = vmax.f32 %v72, 0.0
    %v105 = vmax.f32 %v73, 0.0
    %v106 = vmax.f32 %v74, 0.0
    %v107 = vmax.f32 %v75, 0.0
    %v108 = vmax.f32 %v76, 0.0
    %v109 = vmax.f32 %v77, 0.0
    %v110 = vmax.f32 %v78, 0.0
    %v111 = vmax.f32 %v79, 0.0
    %v112 = vmax.f32 %v80, 0.0
    %v113 = vmax.f32 %v81, 0.0
    %v114 = vmax.f32 %v82, 0.0
    %v115 = vmax.f32 %v83, 0.0
    %v116 = vmax.f32 %v84, 0.0
    %v117 = vmax.f32 %v85, 0.0
    %v118 = vmax.f32 %v86, 0.0
    %v119 = vmax.f32 %v87, 0.0
    %v120 = vmax.f32 %v88, 0.0
    %v121 = vmax.f32 %v89, 0.0
    %122 = vmatprep.subr.mxu0 0.0
    %123 = vmatpush1.xpose.msra.mxu0 %v90
    %124 = vmatprep.subr.mxu0 0.0
    %125 = vmatpush1.xpose.msra.mxu0 %v91
    %126 = vmatprep.subr.mxu0 0.0
    %127 = vmatpush1.xpose.msra.mxu0 %v92
    %128 = vmatprep.subr.mxu0 0.0
    %129 = vmatpush1.xpose.msra.mxu0 %v93
    %130 = vmatprep.subr.mxu0 0.0
    %131 = vmatpush1.xpose.msra.mxu0 %v94
    %132 = vmatprep.subr.mxu0 0.0
    %133 = vmatpush1.xpose.msra.mxu0 %v95
    %134 = vmatprep.subr.mxu0 0.0
    %135 = vmatpush1.xpose.msra.mxu0 %v96
    %136 = vmatprep.subr.mxu0 0.0
    %137 = vmatpush1.xpose.msra.mxu0 %v97
    %138 = vmatprep.subr.mxu0 0.0
    %139 = vmatpush1.xpose.msra.mxu0 %v98
    %140 = vmatprep.subr.mxu0 0.0
    %141 = vmatpush1.xpose.msra.mxu0 %v99
    %142 = vmatprep.subr.mxu0 0.0
    %143 = vmatpush1.xpose.msra.mxu0 %v100
    %144 = vmatprep.subr.mxu0 0.0
    %145 = vmatpush1.xpose.msra.mxu0 %v101
    %146 = vmatprep.subr.mxu0 0.0
    %147 = vmatpush1.xpose.msra.mxu0 %v102
    %148 = vmatprep.subr.mxu0 0.0
    %149 = vmatpush1.xpose.msra.mxu0 %v103
    %150 = vmatprep.subr.mxu0 0.0
    %151 = vmatpush1.xpose.msra.mxu0 %v104
    %152 = vmatprep.subr.mxu0 0.0
    %153 = vmatpush1.xpose.msra.mxu0 %v105
    %154 = vmatprep.subr.mxu0 0.0
    %155 = vmatpush1.xpose.msra.mxu0 %v106
    %156 = vmatprep.subr.mxu0 0.0
    %157 = vmatpush1.xpose.msra.mxu0 %v107
    %158 = vmatprep.subr.mxu0 0.0
    %159 = vmatpush1.xpose.msra.mxu0 %v108
    %160 = vmatprep.subr.mxu0 0.0
    %161 = vmatpush1.xpose.msra.mxu0 %v109
    %162 = vmatprep.subr.mxu0 0.0
    %163 = vmatpush1.xpose.msra.mxu0 %v110
    %164 = vmatprep.subr.mxu0 0.0
    %165 = vmatpush1.xpose.msra.mxu0 %v111
    %166 = vmatprep.subr.mxu0 0.0
    %167 = vmatpush1.xpose.msra.mxu0 %v112
    %168 = vmatprep.subr.mxu0 0.0
    %169 = vmatpush1.xpose.msra.mxu0 %v113
    %170 = vmatprep.subr.mxu0 0.0
    %171 = vmatpush1.xpose.msra.mxu0 %v114
    %172 = vmatprep.subr.mxu0 0.0
    %173 = vmatpush1.xpose.msra.mxu0 %v115
    %174 = vmatprep.subr.mxu0 0.0
    %175 = vmatpush1.xpose.msra.mxu0 %v116
    %176 = vmatprep.subr.mxu0 0.0
    %177 = vmatpush1.xpose.msra.mxu0 %v117
    %178 = vmatprep.subr.mxu0 0.0
    %179 = vmatpush1.xpose.msra.mxu0 %v118
    %180 = vmatprep.subr.mxu0 0.0
    %181 = vmatpush1.xpose.msra.mxu0 %v119
    %182 = vmatprep.subr.mxu0 0.0
    %183 = vmatpush1.xpose.msra.mxu0 %v120
    %184 = vmatprep.subr.mxu0 0.0
    %185 = vmatpush1.xpose.msra.mxu0 %v121
    %186 = vmatprep.mubr.f32.mxu0 0.0
    %187 = vmatmul.mubr.f32.gmra.mrb[0].mxu0 %v56
    %v188 = vpop.f32.mrb[0].mxu0
    %v189 = vadd.f32 1e-05, %v188
    %v190 = vpop.f32.mrb[0].mxu0
    %v191 = vadd.f32 1e-05, %v190
    %192 = vmatprep.mubr.f32.mxu0 0.0
    %193 = vmatmul.mubr.f32.gmra.mrb[0].mxu0 %v57
    %v194 = vpop.f32.mrb[0].mxu0
    %v195 = vadd.f32 1e-05, %v194
    %v196 = vpop.f32.mrb[0].mxu0
    %v197 = vadd.f32 1e-05, %v196
    %198 = vdwg.mxu0
    %v199 = vrcp.pop %v189
    %v200 = vrcp.pop %v191
    %v201 = vrcp.pop %v195
    %v202 = vrcp.pop %v197
    %v203 = vmul.f32 %v189, %v199
    %v204 = vmul.f32 %v191, %v200
    %v205 = vmul.f32 %v195, %v201
    %v206 = vmul.f32 %v197, %v202
    %v207 = vsub.f32 2.0, %v203
    %v208 = vsub.f32 2.0, %v204
    %v209 = vsub.f32 2.0, %v205
    %v210 = vsub.f32 2.0, %v206
    %v211 = vmul.f32 %v199, %v207
    %v212 = vmul.f32 %v200, %v208
    %v213 = vmul.f32 %v201, %v209
    %v214 = vmul.f32 %v202, %v210
    %v215 = vld [vmem:[#allocation5] sm:$0xff]
    %v216 = vld [vmem:[#allocation5 + $0x8] sm:$0xff]
    %v217 = vld [vmem:[#allocation5 + $0x10] sm:$0xff]
    %v218 = vld [vmem:[#allocation5 + $0x18] sm:$0xff]
    %v219 = vmul.f32 %v215, %v211
    %v220 = vmul.f32 %v216, %v212
    %v221 = vmul.f32 %v217, %v213
    %v222 = vmul.f32 %v218, %v214
    %223 = vmatprep.subr.mxu0 0.0
    %224 = vmatpush1.msra.mxu0 %v90
    %225 = vmatprep.subr.mxu0 0.0
    %226 = vmatpush1.msra.mxu0 %v91
    %227 = vmatprep.subr.mxu0 0.0
    %228 = vmatpush1.msra.mxu0 %v92
    %229 = vmatprep.subr.mxu0 0.0
    %230 = vmatpush1.msra.mxu0 %v93
    %231 = vmatprep.subr.mxu0 0.0
    %232 = vmatpush1.msra.mxu0 %v94
    %233 = vmatprep.subr.mxu0 0.0
    %234 = vmatpush1.msra.mxu0 %v95
    %235 = vmatprep.subr.mxu0 0.0
    %236 = vmatpush1.msra.mxu0 %v96
    %237 = vmatprep.subr.mxu0 0.0
    %238 = vmatpush1.msra.mxu0 %v97
    %239 = vmatprep.subr.mxu0 0.0
    %240 = vmatpush1.msra.mxu0 %v98
    %241 = vmatprep.subr.mxu0 0.0
    %242 = vmatpush1.msra.mxu0 %v99
    %243 = vmatprep.subr.mxu0 0.0
    %244 = vmatpush1.msra.mxu0 %v100
    %245 = vmatprep.subr.mxu0 0.0
    %246 = vmatpush1.msra.mxu0 %v101
    %247 = vmatprep.subr.mxu0 0.0
    %248 = vmatpush1.msra.mxu0 %v102
    %249 = vmatprep.subr.mxu0 0.0
    %250 = vmatpush1.msra.mxu0 %v103
    %251 = vmatprep.subr.mxu0 0.0
    %252 = vmatpush1.msra.mxu0 %v104
    %253 = vmatprep.subr.mxu0 0.0
    %254 = vmatpush1.msra.mxu0 %v105
    %255 = vmatprep.subr.mxu0 0.0
    %256 = vmatpush1.msra.mxu0 %v106
    %257 = vmatprep.subr.mxu0 0.0
    %258 = vmatpush1.msra.mxu0 %v107
    %259 = vmatprep.subr.mxu0 0.0
    %260 = vmatpush1.msra.mxu0 %v108
    %261 = vmatprep.subr.mxu0 0.0
    %262 = vmatpush1.msra.mxu0 %v109
    %263 = vmatprep.subr.mxu0 0.0
    %264 = vmatpush1.msra.mxu0 %v110
    %265 = vmatprep.subr.mxu0 0.0
    %266 = vmatpush1.msra.mxu0 %v111
    %267 = vmatprep.subr.mxu0 0.0
    %268 = vmatpush1.msra.mxu0 %v112
    %269 = vmatprep.subr.mxu0 0.0
    %270 = vmatpush1.msra.mxu0 %v113
    %271 = vmatprep.subr.mxu0 0.0
    %272 = vmatpush1.msra.mxu0 %v114
    %273 = vmatprep.subr.mxu0 0.0
    %274 = vmatpush1.msra.mxu0 %v115
    %275 = vmatprep.subr.mxu0 0.0
    %276 = vmatpush1.msra.mxu0 %v116
    %277 = vmatprep.subr.mxu0 0.0
    %278 = vmatpush1.msra.mxu0 %v117
    %279 = vmatprep.subr.mxu0 0.0
    %280 = vmatpush1.msra.mxu0 %v118
    %281 = vmatprep.subr.mxu0 0.0
    %282 = vmatpush1.msra.mxu0 %v119
    %283 = vmatprep.subr.mxu0 0.0
    %284 = vmatpush1.msra.mxu0 %v120
    %285 = vmatprep.subr.mxu0 0.0
    %286 = vmatpush1.msra.mxu0 %v121
    %287 = vmatprep.mubr.f32.mxu0 %v220
    %288 = vmatmul.mubr.f32.gmra.mrb[0].mxu0 %v219
    %v289 = vpop.f32.mrb[0].mxu0
    %v290 = vadd.f32 0.0, %v289
    %v291 = vpop.f32.mrb[0].mxu0
    %292 = vmatprep.mubr.f32.mxu0 %v222
    %293 = vmatmul.mubr.f32.gmra.mrb[0].mxu0 %v221
    %v294 = vpop.f32.mrb[0].mxu0
    %v295 = vadd.f32 0.0, %v294
    %v296 = vpop.f32.mrb[0].mxu0
    %297 = vdwg.mxu0
    %v298 = vmul.f32 %v56, %v290
    %v299 = vmul.f32 %v57, %v295
    %300 = vst [vmem:[#allocation8] sm:$0xff] %v298
    %301 = vst [vmem:[#allocation8 + $0x8] sm:$0xff] %v299
    // Predicated region
    $region26: #{tpu_custom_call.1} parent=1 // pred_check
      _
    $region27: #{tpu_custom_call.1} parent=1 // pred_check_branch
      %303 = sbr.rel (0) target = $region29
    $region28: #{tpu_custom_call.1} parent=1 // pred_region
      %s305 = ssub.s32 256, 256
      %306 = vsyncadd [#allocation4], %s305
      %s307 = sshll.u32 [#allocation8], 4
      %s308 = int_to_ptr.vmem [resolvable:$true] %s307
      %313 = dma.vmem_to_hbm [thread:$0]  %s308, 256, %s3, [#allocation4], 128, 128, 8
    $region29: #{tpu_custom_call.1} parent=1 // pred_fallthru
      _
    // Predicated region
    $region30: #{tpu_custom_call.1} parent=1 // pred_check
      _
    $region31: #{tpu_custom_call.1} parent=1 // pred_check_branch
      %315 = sbr.rel (0) target = $region33
    $region32: #{tpu_custom_call.1} parent=1 // pred_region
      %316 = dma.done [#allocation4], 256
    $region33: #{tpu_custom_call.1} parent=1 // pred_fallthru
      _
    %317 = vsyncpa [#allocation3], 1
    %318 = vsyncpa [#allocation6], 1
    %319 = vsyncpa [#allocation4], 1

</llo_original>
